<compile_context>
chip_gen: v7x
topology: tpu7x:2x2x1
jax: 0.10.0
libtpu: 0.0.40
codegen_flags: <defaults>
</compile_context>

<pallas_src>
import functools

import jax
import jax.numpy as jnp
from jax.experimental import pallas as pl
from jax.experimental.pallas import tpu as pltpu


_LANE = 128     # TPU lane width: feature dims padded to this for dense stores/MXU
_SUBLANE = 8


def _round_up(n, m):
    return ((n + m - 1) // m) * m


# --------------------------------------------------------------------------- #
# Kernel body: the whole MLP fused — activations never leave VMEM/vregs.
# --------------------------------------------------------------------------- #
def _fused_mlp_kernel(x_ref, *refs, num_layers, use_biases):
    """refs = (w0[, b0], w1[, b1], ..., out_ref); weights are (Din, Dout)."""
    out_ref = refs[-1]
    p_refs = refs[:-1]

    h = x_ref[...]
    for layer in range(num_layers):
        if use_biases:
            w_ref = p_refs[2 * layer]
            b_ref = p_refs[2 * layer + 1]
        else:
            w_ref = p_refs[layer]
            b_ref = None

        # Canonical MXU contraction (tile_b, Din) @ (Din, Dout), f32 accumulate.
        acc = jnp.dot(h.astype(w_ref.dtype), w_ref[...],
                      preferred_element_type=jnp.float32)
        if b_ref is not None:
            acc = acc + b_ref[...].astype(jnp.float32)
            if layer != num_layers - 1:      # spec: no ReLU on the last layer
                acc = jnp.maximum(acc, 0.0)
        # spec: the no-bias branch applies no ReLU anywhere.
        h = acc

    out_ref[...] = h.astype(out_ref.dtype)


# --------------------------------------------------------------------------- #
# One-time parameter prep (hoisted out of the forward pass).
# --------------------------------------------------------------------------- #
def prepare_fneural_params(params, use_biases=True, *, param_dtype=jnp.bfloat16):
    """Prep PyTorch-convention params for the fused kernel.

    * F.linear (Dout, Din) weights -> transposed (Din, Dout) for the canonical
      MXU shape (x @ w), no in-kernel transposes.
    * Every hidden/output feature dim is zero-padded to a multiple of 128 so
      all matmul N dims and the output stores are lane-dense.  Padded columns
      stay exactly zero through bias-add / ReLU, so results are unchanged.
      The first layer's Din (== x feature dim) is left unpadded so x itself
      never needs a padding copy.
    * Weights optionally cast to `param_dtype` (bf16 by default); biases stay
      f32 — they are added into the f32 accumulator.

    Returns (prepared_param_list, true_out_features).
    """
    if use_biases:
        assert len(params) % 2 == 0
        ws = [jnp.asarray(params[i]) for i in range(0, len(params), 2)]
        bs = [jnp.asarray(params[i]) for i in range(1, len(params), 2)]
    else:
        ws = [jnp.asarray(w) for w in params]
        bs = [None] * len(ws)

    prepared = []
    prev_out, prev_out_pad = None, None
    for w, b in zip(ws, bs):
        d_out, d_in = w.shape
        if prev_out is not None:
            assert d_in == prev_out, "layer dims do not chain"
        d_in_pad = d_in if prev_out_pad is None else prev_out_pad
        d_out_pad = _round_up(d_out, _LANE)
        wt = jnp.pad(w.T, ((0, d_in_pad - d_in), (0, d_out_pad - d_out)))
        if param_dtype is not None:
            wt = wt.astype(param_dtype)
        prepared.append(wt)
        if b is not None:
            bp = jnp.pad(b.reshape(1, -1), ((0, 0), (0, d_out_pad - d_out)))
            prepared.append(bp.astype(jnp.float32))
        prev_out, prev_out_pad = d_out, d_out_pad

    return prepared, int(ws[-1].shape[0])


# --------------------------------------------------------------------------- #
# Forward wrapper.
# --------------------------------------------------------------------------- #
def fneural_network_forward(x, params, use_biases=True, *, out_features=None,
                            prepared=False, tile_b=2048, interpret=False):
    """Mirrors FNeuralNetwork.forward as one fused Pallas TPU kernel.

    `params` may be raw PyTorch-convention params (prepared=False) or the
    output of prepare_fneural_params (prepared=True, preferred: prep runs once).
    """
    if not prepared:
        params, out_features = prepare_fneural_params(params, use_biases=use_biases)
    assert out_features is not None, "pass out_features together with prepared=True"

    B, Din = x.shape
    if use_biases:
        num_layers = len(params) // 2
        weights = params[0::2]
    else:
        num_layers = len(params)
        weights = params
    assert weights[0].shape[0] == Din, (weights[0].shape, Din)
    dout_pad = weights[-1].shape[1]

    # ---- resident-weight budget check -------------------------------------
    param_bytes = sum(int(p.size) * p.dtype.itemsize for p in params)
    if param_bytes > 40 * 2**20:
        # TODO(synk): add a K/N-tiled (reduction grid axis + VMEM f32
        # accumulator) fallback for layers whose weights do not fit resident
        # in VMEM (v7x has only 64 MiB per TensorCore).
        raise NotImplementedError(
            f"{param_bytes / 2**20:.1f} MiB of parameters exceeds the "
            "all-weights-resident VMEM budget")

    # ---- batch tiling: minimal padding; >=2 tiles for megacore at large B --
    max_tile = max(_SUBLANE, min(int(tile_b), B))
    n_tiles = pl.cdiv(B, max_tile)
    if B >= 512:
        n_tiles = max(n_tiles, 2)   # v7x: shard the "parallel" axis on both TCs
    tb = _round_up(pl.cdiv(B, n_tiles), _SUBLANE)
    if tb >= B:
        tb, grid_b, b_pad = B, 1, B          # single full-extent tile, no pad
    else:
        grid_b = pl.cdiv(B, tb)
        b_pad = grid_b * tb                  # pads at most 7 rows per tile
    x_in = x if b_pad == B else jnp.pad(x, ((0, b_pad - B), (0, 0)))

    # ---- VMEM limit + cost estimate from the real footprint ----------------
    itemsize = x.dtype.itemsize
    max_width = max(dout_pad, Din, *(w.shape[1] for w in weights))
    vmem_needed = (param_bytes                       # resident params
                   + 2 * tb * Din * itemsize         # activation tiles (dbl buf)
                   + 2 * tb * dout_pad * itemsize    # output tiles (dbl buf)
                   + 2 * tb * max_width * 4)         # f32 intermediates
    vmem_limit = int(min(64 * 2**20, max(2 * vmem_needed, 8 * 2**20)))

    flops = 2 * b_pad * sum(w.shape[0] * w.shape[1] for w in weights)
    bytes_accessed = int(x_in.size * itemsize + param_bytes
                         + b_pad * dout_pad * itemsize)

    kernel = functools.partial(_fused_mlp_kernel,
                               num_layers=num_layers, use_biases=use_biases)
    out_shape = jax.ShapeDtypeStruct((b_pad, dout_pad), x.dtype)
    x_spec = pl.BlockSpec((tb, Din), lambda i: (i, 0))
    out_spec = pl.BlockSpec((tb, dout_pad), lambda i: (i, 0))

    def call(single_buffer_params):
        in_specs = [x_spec]
        for p in params:
            if single_buffer_params:
                # Constant block index -> parameter stays resident in VMEM;
                # Buffered(1) drops the pointless second pipeline buffer.
                spec = pl.BlockSpec(p.shape, lambda i: (0, 0),
                                    pipeline_mode=pl.Buffered(1))
            else:
                spec = pl.BlockSpec(p.shape, lambda i: (0, 0))
            in_specs.append(spec)
        return pl.pallas_call(
            kernel,
            out_shape=out_shape,
            grid=(grid_b,),
            in_specs=in_specs,
            out_specs=out_spec,
            compiler_params=pltpu.CompilerParams(
                dimension_semantics=("parallel",),
                vmem_limit_bytes=vmem_limit),
            cost_estimate=pl.CostEstimate(flops=flops, transcendentals=0,
                                          bytes_accessed=bytes_accessed),
            interpret=interpret,
        )(x_in, *params)

    try:
        out = call(single_buffer_params=True)
    except Exception:
        # Fallback for jax builds that reject BlockSpec(pipeline_mode=...).
        out = call(single_buffer_params=False)

    # Drop batch padding and the lane-padding of the last feature dim.
    return out[:B, :out_features]


# --------------------------------------------------------------------------- #
# Pure-JAX reference (raw PyTorch-convention params).
# --------------------------------------------------------------------------- #
def _reference_forward(x, params, use_biases=True):
    out = x
    if use_biases:
        for i in range(0, len(params), 2):
            w, b = params[i], params[i + 1]
            out = out @ w.T + b
            if i != len(params) - 2:
                out = jnp.maximum(out, 0.0)
    else:
        for w in params:
            out = out @ w.T
    return out


if __name__ == "__main__":
    key = jax.random.PRNGKey(0)

    batch = 8
    dims = [32, 64, 48, 16]  # in -> hidden -> hidden -> out

    key, kx = jax.random.split(key)
    x = jax.random.normal(kx, (batch, dims[0]), dtype=jnp.float32)

    params = []
    for d_in, d_out in zip(dims[:-1], dims[1:]):
        key, kw, kb = jax.random.split(key, 3)
        scale = 1.0 / jnp.sqrt(jnp.float32(d_in))
        w = jax.random.uniform(kw, (d_out, d_in), jnp.float32, -scale, scale)
        b = jax.random.uniform(kb, (d_out,), jnp.float32, -scale, scale)
        params += [w, b]

    ref = _reference_forward(x, params, use_biases=True)

    # --- f32 params: exact-path check ---------------------------------------
    p_f32, dout = prepare_fneural_params(params, use_biases=True, param_dtype=None)
    out_f32 = fneural_network_forward(x, p_f32, use_biases=True,
                                      out_features=dout, prepared=True)
    out_f32 = jax.block_until_ready(out_f32)
    assert out_f32.shape == (batch, dims[-1]), out_f32.shape
    assert jnp.allclose(out_f32, ref, atol=1e-5, rtol=1e-5), "mismatch (f32)"

    # --- bf16 params (default, MXU-native): loose tolerance -----------------
    p_bf16, dout = prepare_fneural_params(params, use_biases=True)
    out_bf16 = fneural_network_forward(x, p_bf16, use_biases=True,
                                       out_features=dout, prepared=True)
    out_bf16 = jax.block_until_ready(out_bf16)
    assert jnp.allclose(out_bf16, ref, atol=5e-2, rtol=5e-2), "mismatch (bf16)"

    # --- no-bias path (no ReLU anywhere, per the PyTorch spec) --------------
    p_nb, dout_nb = prepare_fneural_params(params[0::2], use_biases=False,
                                           param_dtype=None)
    out_nb = fneural_network_forward(x, p_nb, use_biases=False,
                                     out_features=dout_nb, prepared=True)
    out_nb = jax.block_until_ready(out_nb)
    ref_nb = _reference_forward(x, params[0::2], use_biases=False)
    assert jnp.allclose(out_nb, ref_nb, atol=1e-5, rtol=1e-5), "mismatch (no bias)"

    # --- batch-tiled / multi-grid path (parallel axis, resident weights) ----
    key, kx2 = jax.random.split(key)
    xb = jax.random.normal(kx2, (520, dims[0]), dtype=jnp.float32)
    out_b = fneural_network_forward(xb, p_bf16, use_biases=True,
                                    out_features=dout, prepared=True, tile_b=256)
    out_b = jax.block_until_ready(out_b)
    ref_b = _reference_forward(xb, params, use_biases=True)
    assert out_b.shape == (520, dims[-1]), out_b.shape
    assert jnp.allclose(out_b, ref_b, atol=5e-2, rtol=5e-2), "mismatch (tiled batch)"

    print("KERNEL_OK")
</pallas_src>

<mosaic_0001>
module attributes {stable_mosaic.version = 11 : i64} {
  func.func @_fused_mlp_kernel(%arg0: i32, %arg1: memref<8x32xf32, #tpu.memory_space<vmem>>, %arg2: memref<32x128xf32, #tpu.memory_space<vmem>>, %arg3: memref<1x128xf32, #tpu.memory_space<vmem>>, %arg4: memref<128x128xf32, #tpu.memory_space<vmem>>, %arg5: memref<1x128xf32, #tpu.memory_space<vmem>>, %arg6: memref<128x128xf32, #tpu.memory_space<vmem>>, %arg7: memref<1x128xf32, #tpu.memory_space<vmem>>, %arg8: memref<8x128xf32, #tpu.memory_space<vmem>>) attributes {dimension_semantics = [#tpu.dimension_semantics<parallel>], iteration_bounds = array<i64: 1>, scalar_prefetch = 0 : i64, scratch_operands = 0 : i64, tpu.core_type = #tpu.core_type<tc>, window_params = [{transform_indices = @transform_0, window_bounds = array<i64: 8, 32>}, {pipeline_mode = #tpu.pipeline_mode<synchronous>, transform_indices = @transform_1, window_bounds = array<i64: 32, 128>}, {pipeline_mode = #tpu.pipeline_mode<synchronous>, transform_indices = @transform_2, window_bounds = array<i64: 1, 128>}, {pipeline_mode = #tpu.pipeline_mode<synchronous>, transform_indices = @transform_3, window_bounds = array<i64: 128, 128>}, {pipeline_mode = #tpu.pipeline_mode<synchronous>, transform_indices = @transform_4, window_bounds = array<i64: 1, 128>}, {pipeline_mode = #tpu.pipeline_mode<synchronous>, transform_indices = @transform_5, window_bounds = array<i64: 128, 128>}, {pipeline_mode = #tpu.pipeline_mode<synchronous>, transform_indices = @transform_6, window_bounds = array<i64: 1, 128>}, {transform_indices = @transform_7, window_bounds = array<i64: 8, 128>}]} {
    %c0 = arith.constant 0 : index
    %c0_0 = arith.constant 0 : index
    %0 = vector.load %arg1[%c0, %c0_0] : memref<8x32xf32, #tpu.memory_space<vmem>>, vector<8x32xf32>
    %c0_1 = arith.constant 0 : index
    %c0_2 = arith.constant 0 : index
    %1 = vector.load %arg2[%c0_1, %c0_2] : memref<32x128xf32, #tpu.memory_space<vmem>>, vector<32x128xf32>
    %cst = arith.constant dense<0.000000e+00> : vector<8x128xf32>
    %2 = tpu.matmul %0, %1, %cst {dimension_numbers = #tpu.dot_dimension_numbers<[1], [0], [0], [1], [0, 0, 1, 1], [], []>} : vector<8x32xf32>, vector<32x128xf32>, vector<8x128xf32> -> vector<8x128xf32>
    %c0_3 = arith.constant 0 : index
    %c0_4 = arith.constant 0 : index
    %3 = vector.load %arg3[%c0_3, %c0_4] : memref<1x128xf32, #tpu.memory_space<vmem>>, vector<1x128xf32>
    %4 = vector.broadcast %3 : vector<1x128xf32> to vector<8x128xf32>
    %5 = arith.addf %2, %4 : vector<8x128xf32>
    %cst_5 = arith.constant 0.000000e+00 : f32
    %6 = vector.broadcast %cst_5 : f32 to vector<8x128xf32>
    %7 = arith.maximumf %5, %6 : vector<8x128xf32>
    %c0_6 = arith.constant 0 : index
    %c0_7 = arith.constant 0 : index
    %8 = vector.load %arg4[%c0_6, %c0_7] : memref<128x128xf32, #tpu.memory_space<vmem>>, vector<128x128xf32>
    %cst_8 = arith.constant dense<0.000000e+00> : vector<8x128xf32>
    %9 = tpu.matmul %7, %8, %cst_8 {dimension_numbers = #tpu.dot_dimension_numbers<[1], [0], [0], [1], [0, 0, 1, 1], [], []>} : vector<8x128xf32>, vector<128x128xf32>, vector<8x128xf32> -> vector<8x128xf32>
    %c0_9 = arith.constant 0 : index
    %c0_10 = arith.constant 0 : index
    %10 = vector.load %arg5[%c0_9, %c0_10] : memref<1x128xf32, #tpu.memory_space<vmem>>, vector<1x128xf32>
    %11 = vector.broadcast %10 : vector<1x128xf32> to vector<8x128xf32>
    %12 = arith.addf %9, %11 : vector<8x128xf32>
    %cst_11 = arith.constant 0.000000e+00 : f32
    %13 = vector.broadcast %cst_11 : f32 to vector<8x128xf32>
    %14 = arith.maximumf %12, %13 : vector<8x128xf32>
    %c0_12 = arith.constant 0 : index
    %c0_13 = arith.constant 0 : index
    %15 = vector.load %arg6[%c0_12, %c0_13] : memref<128x128xf32, #tpu.memory_space<vmem>>, vector<128x128xf32>
    %cst_14 = arith.constant dense<0.000000e+00> : vector<8x128xf32>
    %16 = tpu.matmul %14, %15, %cst_14 {dimension_numbers = #tpu.dot_dimension_numbers<[1], [0], [0], [1], [0, 0, 1, 1], [], []>} : vector<8x128xf32>, vector<128x128xf32>, vector<8x128xf32> -> vector<8x128xf32>
    %c0_15 = arith.constant 0 : index
    %c0_16 = arith.constant 0 : index
    %17 = vector.load %arg7[%c0_15, %c0_16] : memref<1x128xf32, #tpu.memory_space<vmem>>, vector<1x128xf32>
    %18 = vector.broadcast %17 : vector<1x128xf32> to vector<8x128xf32>
    %19 = arith.addf %16, %18 : vector<8x128xf32>
    %c0_17 = arith.constant 0 : index
    %c0_18 = arith.constant 0 : index
    %20 = vector.load %arg8[%c0_17, %c0_18] : memref<8x128xf32, #tpu.memory_space<vmem>>, vector<8x128xf32>
    tpu.vector_store %arg8[%c0_17, %c0_18], %19 {strides = array<i32>} : memref<8x128xf32, #tpu.memory_space<vmem>>, vector<8x128xf32>,
    return
  }
  func.func @transform_0(%arg0: i32) -> (i32, i32) {
    %c0_i32 = arith.constant 0 : i32
    %c0_i32_0 = arith.constant 0 : i32
    return %arg0, %c0_i32 : i32, i32
  }
  func.func @transform_1(%arg0: i32) -> (i32, i32) {
    %c0_i32 = arith.constant 0 : i32
    %c0_i32_0 = arith.constant 0 : i32
    %c0_i32_1 = arith.constant 0 : i32
    return %c0_i32, %c0_i32_0 : i32, i32
  }
  func.func @transform_2(%arg0: i32) -> (i32, i32) {
    %c0_i32 = arith.constant 0 : i32
    %c0_i32_0 = arith.constant 0 : i32
    %c0_i32_1 = arith.constant 0 : i32
    return %c0_i32, %c0_i32_0 : i32, i32
  }
  func.func @transform_3(%arg0: i32) -> (i32, i32) {
    %c0_i32 = arith.constant 0 : i32
    %c0_i32_0 = arith.constant 0 : i32
    %c0_i32_1 = arith.constant 0 : i32
    return %c0_i32, %c0_i32_0 : i32, i32
  }
  func.func @transform_4(%arg0: i32) -> (i32, i32) {
    %c0_i32 = arith.constant 0 : i32
    %c0_i32_0 = arith.constant 0 : i32
    %c0_i32_1 = arith.constant 0 : i32
    return %c0_i32, %c0_i32_0 : i32, i32
  }
  func.func @transform_5(%arg0: i32) -> (i32, i32) {
    %c0_i32 = arith.constant 0 : i32
    %c0_i32_0 = arith.constant 0 : i32
    %c0_i32_1 = arith.constant 0 : i32
    return %c0_i32, %c0_i32_0 : i32, i32
  }
  func.func @transform_6(%arg0: i32) -> (i32, i32) {
    %c0_i32 = arith.constant 0 : i32
    %c0_i32_0 = arith.constant 0 : i32
    %c0_i32_1 = arith.constant 0 : i32
    return %c0_i32, %c0_i32_0 : i32, i32
  }
  func.func @transform_7(%arg0: i32) -> (i32, i32) {
    %c0_i32 = arith.constant 0 : i32
    %c0_i32_0 = arith.constant 0 : i32
    return %arg0, %c0_i32 : i32, i32
  }
}

module attributes {stable_mosaic.version = 11 : i64} {
  func.func @_fused_mlp_kernel(%arg0: i32, %arg1: memref<8x32xf32, #tpu.memory_space<vmem>>, %arg2: memref<32x128xf32, #tpu.memory_space<vmem>>, %arg3: memref<1x128xf32, #tpu.memory_space<vmem>>, %arg4: memref<128x128xf32, #tpu.memory_space<vmem>>, %arg5: memref<1x128xf32, #tpu.memory_space<vmem>>, %arg6: memref<128x128xf32, #tpu.memory_space<vmem>>, %arg7: memref<1x128xf32, #tpu.memory_space<vmem>>, %arg8: memref<8x128xf32, #tpu.memory_space<vmem>>) attributes {dimension_semantics = [#tpu.dimension_semantics<parallel>], iteration_bounds = array<i64: 1>, scalar_prefetch = 0 : i64, scratch_operands = 0 : i64, tpu.core_type = #tpu.core_type<tc>, window_params = [{transform_indices = @transform_0, window_bounds = array<i64: 8, 32>}, {pipeline_mode = #tpu.pipeline_mode<synchronous>, transform_indices = @transform_1, window_bounds = array<i64: 32, 128>}, {pipeline_mode = #tpu.pipeline_mode<synchronous>, transform_indices = @transform_2, window_bounds = array<i64: 1, 128>}, {pipeline_mode = #tpu.pipeline_mode<synchronous>, transform_indices = @transform_3, window_bounds = array<i64: 128, 128>}, {pipeline_mode = #tpu.pipeline_mode<synchronous>, transform_indices = @transform_4, window_bounds = array<i64: 1, 128>}, {pipeline_mode = #tpu.pipeline_mode<synchronous>, transform_indices = @transform_5, window_bounds = array<i64: 128, 128>}, {pipeline_mode = #tpu.pipeline_mode<synchronous>, transform_indices = @transform_6, window_bounds = array<i64: 1, 128>}, {transform_indices = @transform_7, window_bounds = array<i64: 8, 128>}]} {
    %c0 = arith.constant 0 : index
    %c0_0 = arith.constant 0 : index
    %0 = vector.load %arg1[%c0, %c0_0] : memref<8x32xf32, #tpu.memory_space<vmem>>, vector<8x32xf32>
    %c0_1 = arith.constant 0 : index
    %c0_2 = arith.constant 0 : index
    %1 = vector.load %arg2[%c0_1, %c0_2] : memref<32x128xf32, #tpu.memory_space<vmem>>, vector<32x128xf32>
    %cst = arith.constant dense<0.000000e+00> : vector<8x128xf32>
    %2 = tpu.matmul %0, %1, %cst {dimension_numbers = #tpu.dot_dimension_numbers<[1], [0], [0], [1], [0, 0, 1, 1], [], []>} : vector<8x32xf32>, vector<32x128xf32>, vector<8x128xf32> -> vector<8x128xf32>
    %c0_3 = arith.constant 0 : index
    %c0_4 = arith.constant 0 : index
    %3 = vector.load %arg3[%c0_3, %c0_4] : memref<1x128xf32, #tpu.memory_space<vmem>>, vector<1x128xf32>
    %4 = vector.broadcast %3 : vector<1x128xf32> to vector<8x128xf32>
    %5 = arith.addf %2, %4 : vector<8x128xf32>
    %cst_5 = arith.constant 0.000000e+00 : f32
    %6 = vector.broadcast %cst_5 : f32 to vector<8x128xf32>
    %7 = arith.maximumf %5, %6 : vector<8x128xf32>
    %c0_6 = arith.constant 0 : index
    %c0_7 = arith.constant 0 : index
    %8 = vector.load %arg4[%c0_6, %c0_7] : memref<128x128xf32, #tpu.memory_space<vmem>>, vector<128x128xf32>
    %cst_8 = arith.constant dense<0.000000e+00> : vector<8x128xf32>
    %9 = tpu.matmul %7, %8, %cst_8 {dimension_numbers = #tpu.dot_dimension_numbers<[1], [0], [0], [1], [0, 0, 1, 1], [], []>} : vector<8x128xf32>, vector<128x128xf32>, vector<8x128xf32> -> vector<8x128xf32>
    %c0_9 = arith.constant 0 : index
    %c0_10 = arith.constant 0 : index
    %10 = vector.load %arg5[%c0_9, %c0_10] : memref<1x128xf32, #tpu.memory_space<vmem>>, vector<1x128xf32>
    %11 = vector.broadcast %10 : vector<1x128xf32> to vector<8x128xf32>
    %12 = arith.addf %9, %11 : vector<8x128xf32>
    %cst_11 = arith.constant 0.000000e+00 : f32
    %13 = vector.broadcast %cst_11 : f32 to vector<8x128xf32>
    %14 = arith.maximumf %12, %13 : vector<8x128xf32>
    %c0_12 = arith.constant 0 : index
    %c0_13 = arith.constant 0 : index
    %15 = vector.load %arg6[%c0_12, %c0_13] : memref<128x128xf32, #tpu.memory_space<vmem>>, vector<128x128xf32>
    %cst_14 = arith.constant dense<0.000000e+00> : vector<8x128xf32>
    %16 = tpu.matmul %14, %15, %cst_14 {dimension_numbers = #tpu.dot_dimension_numbers<[1], [0], [0], [1], [0, 0, 1, 1], [], []>} : vector<8x128xf32>, vector<128x128xf32>, vector<8x128xf32> -> vector<8x128xf32>
    %c0_15 = arith.constant 0 : index
    %c0_16 = arith.constant 0 : index
    %17 = vector.load %arg7[%c0_15, %c0_16] : memref<1x128xf32, #tpu.memory_space<vmem>>, vector<1x128xf32>
    %18 = vector.broadcast %17 : vector<1x128xf32> to vector<8x128xf32>
    %19 = arith.addf %16, %18 : vector<8x128xf32>
    %c0_17 = arith.constant 0 : index
    %c0_18 = arith.constant 0 : index
    %20 = vector.load %arg8[%c0_17, %c0_18] : memref<8x128xf32, #tpu.memory_space<vmem>>, vector<8x128xf32>
    tpu.vector_store %arg8[%c0_17, %c0_18], %19 {strides = array<i32>} : memref<8x128xf32, #tpu.memory_space<vmem>>, vector<8x128xf32>,
    return
  }
  func.func @transform_0(%arg0: i32) -> (i32, i32) {
    %c0_i32 = arith.constant 0 : i32
    %c0_i32_0 = arith.constant 0 : i32
    return %arg0, %c0_i32 : i32, i32
  }
  func.func @transform_1(%arg0: i32) -> (i32, i32) {
    %c0_i32 = arith.constant 0 : i32
    %c0_i32_0 = arith.constant 0 : i32
    %c0_i32_1 = arith.constant 0 : i32
    return %c0_i32, %c0_i32_0 : i32, i32
  }
  func.func @transform_2(%arg0: i32) -> (i32, i32) {
    %c0_i32 = arith.constant 0 : i32
    %c0_i32_0 = arith.constant 0 : i32
    %c0_i32_1 = arith.constant 0 : i32
    return %c0_i32, %c0_i32_0 : i32, i32
  }
  func.func @transform_3(%arg0: i32) -> (i32, i32) {
    %c0_i32 = arith.constant 0 : i32
    %c0_i32_0 = arith.constant 0 : i32
    %c0_i32_1 = arith.constant 0 : i32
    return %c0_i32, %c0_i32_0 : i32, i32
  }
  func.func @transform_4(%arg0: i32) -> (i32, i32) {
    %c0_i32 = arith.constant 0 : i32
    %c0_i32_0 = arith.constant 0 : i32
    %c0_i32_1 = arith.constant 0 : i32
    return %c0_i32, %c0_i32_0 : i32, i32
  }
  func.func @transform_5(%arg0: i32) -> (i32, i32) {
    %c0_i32 = arith.constant 0 : i32
    %c0_i32_0 = arith.constant 0 : i32
    %c0_i32_1 = arith.constant 0 : i32
    return %c0_i32, %c0_i32_0 : i32, i32
  }
  func.func @transform_6(%arg0: i32) -> (i32, i32) {
    %c0_i32 = arith.constant 0 : i32
    %c0_i32_0 = arith.constant 0 : i32
    %c0_i32_1 = arith.constant 0 : i32
    return %c0_i32, %c0_i32_0 : i32, i32
  }
  func.func @transform_7(%arg0: i32) -> (i32, i32) {
    %c0_i32 = arith.constant 0 : i32
    %c0_i32_0 = arith.constant 0 : i32
    return %arg0, %c0_i32 : i32, i32
  }
}

</mosaic_0001>

<llo_original>
// kernel: tpu_custom_call.1
$region0: #{tpu_custom_call.1}
  #allocation0 [shape = 'u32[]', space=smem, size = 0x4, offset = 0x4, fixed_abs, tag = 'smem constant byte address 0x4 - core index']
  #allocation1 [shape = 'u32[144,128]{1,0:T(1,128)}', space=vmem, size = 0x12000, scoped, tag = 'internal scratch']
  %s0 = inlined_call_operand.hbm [shape: f32[8,32], index: 0, kind: input, shape index: {}]
  %s1 = inlined_call_operand.hbm [shape: f32[32,128], index: 1, kind: input, shape index: {}]
  %s2 = inlined_call_operand.vmem [shape: f32[1,128], index: 2, kind: input, shape index: {}]
  %s3 = inlined_call_operand.hbm [shape: f32[128,128], index: 3, kind: input, shape index: {}]
  %s4 = inlined_call_operand.vmem [shape: f32[1,128], index: 4, kind: input, shape index: {}]
  %s5 = inlined_call_operand.hbm [shape: f32[128,128], index: 5, kind: input, shape index: {}]
  %s6 = inlined_call_operand.vmem [shape: f32[1,128], index: 6, kind: input, shape index: {}]
  %s7 = inlined_call_operand.hbm [shape: f32[8,128], index: 7, kind: output, shape index: {}]
  %s8 = sld [smem:[#allocation0]]
  $region54: #{tpu_custom_call.1} parent=0
    _
  %s10 = ssub.s32 1, %s8
  %s11 = scalar_select 0, %s10, %s8
  $region1: #{tpu_custom_call.1} parent=0
    #allocation2 [shape = 'u8[4096]{0}', space=vmem, size = 0x1000, scoped, tag = 'input window, operand 0, single buffered']
    #allocation3 [shape = 's32[1]{0}', space=sflag, size = 0x4, scoped, tag = 'scoped memory for tpu_custom_call.1']
    #allocation4 [shape = 's32[1]{0}', space=sflag, size = 0x4, scoped, tag = 'scoped memory for tpu_custom_call.1']
    #allocation5 [shape = 'u8[16384]{0}', space=vmem, size = 0x4000, scoped, tag = 'input window, operand 1, single buffered']
    #allocation6 [shape = 's32[1]{0}', space=sflag, size = 0x4, scoped, tag = 'scoped memory for tpu_custom_call.1']
    #allocation7 [shape = 'u8[65536]{0}', space=vmem, size = 0x10000, scoped, tag = 'input window, operand 3, single buffered']
    #allocation8 [shape = 'u8[65536]{0}', space=vmem, size = 0x10000, scoped, tag = 'input window, operand 5, single buffered']
    #allocation9 [shape = 's32[1]{0}', space=sflag, size = 0x4, scoped, tag = 'scoped memory for tpu_custom_call.1']
    #allocation10 [shape = 'u8[4096]{0}', space=vmem, size = 0x1000, scoped, tag = 'output window, operand 0, single buffered']
    %12 = vsyncpa [#allocation3], 0
    %13 = vsyncpa [#allocation6], 0
    %14 = vsyncpa [#allocation9], 0
    %15 = vsyncpa [#allocation4], 0
    // Predicated region
    $region2: #{tpu_custom_call.1} parent=1 // pred_check
      _
    $region3: #{tpu_custom_call.1} parent=1 // pred_check_branch
      %17 = sbr.rel (0) target = $region5
    $region4: #{tpu_custom_call.1} parent=1 // pred_region
      %s19 = ssub.s32 128, 128
      %20 = vsyncadd [#allocation3], %s19
      %s22 = sshll.u32 [#allocation2], 4
      %s23 = int_to_ptr.vmem [resolvable:$true] %s22
      %25 = dma.hbm_to_vmem [thread:$0]  %s0, 128, %s23, [#allocation3]
    $region5: #{tpu_custom_call.1} parent=1 // pred_fallthru
      _
    // Predicated region
    $region6: #{tpu_custom_call.1} parent=1 // pred_check
      _
    $region7: #{tpu_custom_call.1} parent=1 // pred_check_branch
      %27 = sbr.rel (0) target = $region9
    $region8: #{tpu_custom_call.1} parent=1 // pred_region
      %s29 = ssub.s32 512, 512
      %30 = vsyncadd [#allocation6], %s29
      %s31 = sshll.u32 [#allocation5], 4
      %s32 = int_to_ptr.vmem [resolvable:$true] %s31
      %37 = dma.hbm_to_vmem [thread:$0]  %s1, 512, %s32, [#allocation6], 128, 128, 8
    $region9: #{tpu_custom_call.1} parent=1 // pred_fallthru
      _
    // Predicated region
    $region10: #{tpu_custom_call.1} parent=1 // pred_check
      _
    $region11: #{tpu_custom_call.1} parent=1 // pred_check_branch
      %39 = sbr.rel (0) target = $region13
    $region12: #{tpu_custom_call.1} parent=1 // pred_region
      _
    $region13: #{tpu_custom_call.1} parent=1 // pred_fallthru
      _
    // Predicated region
    $region14: #{tpu_custom_call.1} parent=1 // pred_check
      _
    $region15: #{tpu_custom_call.1} parent=1 // pred_check_branch
      %41 = sbr.rel (0) target = $region17
    $region16: #{tpu_custom_call.1} parent=1 // pred_region
      %s43 = ssub.s32 2048, 2048
      %44 = vsyncadd [#allocation6], %s43
      %s45 = sshll.u32 [#allocation7], 4
      %s46 = int_to_ptr.vmem [resolvable:$true] %s45
      %51 = dma.hbm_to_vmem [thread:$0]  %s3, 2048, %s46, [#allocation6], 128, 128, 8
    $region17: #{tpu_custom_call.1} parent=1 // pred_fallthru
      _
    // Predicated region
    $region18: #{tpu_custom_call.1} parent=1 // pred_check
      _
    $region19: #{tpu_custom_call.1} parent=1 // pred_check_branch
      %53 = sbr.rel (0) target = $region21
    $region20: #{tpu_custom_call.1} parent=1 // pred_region
      _
    $region21: #{tpu_custom_call.1} parent=1 // pred_fallthru
      _
    // Predicated region
    $region22: #{tpu_custom_call.1} parent=1 // pred_check
      _
    $region23: #{tpu_custom_call.1} parent=1 // pred_check_branch
      %55 = sbr.rel (0) target = $region25
    $region24: #{tpu_custom_call.1} parent=1 // pred_region
      %s57 = ssub.s32 2048, 2048
      %58 = vsyncadd [#allocation9], %s57
      %s59 = sshll.u32 [#allocation8], 4
      %s60 = int_to_ptr.vmem [resolvable:$true] %s59
      %65 = dma.hbm_to_vmem [thread:$0]  %s5, 2048, %s60, [#allocation9], 128, 128, 8
    $region25: #{tpu_custom_call.1} parent=1 // pred_fallthru
      _
    // Predicated region
    $region26: #{tpu_custom_call.1} parent=1 // pred_check
      _
    $region27: #{tpu_custom_call.1} parent=1 // pred_check_branch
      %67 = sbr.rel (0) target = $region29
    $region28: #{tpu_custom_call.1} parent=1 // pred_region
      _
    $region29: #{tpu_custom_call.1} parent=1 // pred_fallthru
      _
    // Predicated region
    $region30: #{tpu_custom_call.1} parent=1 // pred_check
      _
    $region31: #{tpu_custom_call.1} parent=1 // pred_check_branch
      %69 = sbr.rel (0) target = $region33
    $region32: #{tpu_custom_call.1} parent=1 // pred_region
      %70 = dma.done [#allocation3], 128
    $region33: #{tpu_custom_call.1} parent=1 // pred_fallthru
      _
    // Predicated region
    $region34: #{tpu_custom_call.1} parent=1 // pred_check
      _
    $region35: #{tpu_custom_call.1} parent=1 // pred_check_branch
      %72 = sbr.rel (0) target = $region37
    $region36: #{tpu_custom_call.1} parent=1 // pred_region
      %73 = dma.done [#allocation6], 512
    $region37: #{tpu_custom_call.1} parent=1 // pred_fallthru
      _
    // Predicated region
    $region38: #{tpu_custom_call.1} parent=1 // pred_check
      _
    $region39: #{tpu_custom_call.1} parent=1 // pred_check_branch
      %75 = sbr.rel (0) target = $region41
    $region40: #{tpu_custom_call.1} parent=1 // pred_region
      %76 = dma.done [#allocation6], 2048
    $region41: #{tpu_custom_call.1} parent=1 // pred_fallthru
      _
    // Predicated region
    $region42: #{tpu_custom_call.1} parent=1 // pred_check
      _
    $region43: #{tpu_custom_call.1} parent=1 // pred_check_branch
      %78 = sbr.rel (0) target = $region45
    $region44: #{tpu_custom_call.1} parent=1 // pred_region
      %79 = dma.done [#allocation9], 2048
    $region45: #{tpu_custom_call.1} parent=1 // pred_fallthru
      _
    %v80 = vld [vmem:[#allocation2] sm:$0xff]
    %v81 = vld [vmem:[#allocation5] sm:$0xff]
    %v82 = vld [vmem:[#allocation5 + $0x8] sm:$0xff]
    %v83 = vld [vmem:[#allocation5 + $0x10] sm:$0xff]
    %v84 = vld [vmem:[#allocation5 + $0x18] sm:$0xff]
    %v85 = vld [vmem:[%s2] sm:$0x1]
    %v87 = vlaneseq
    %v88 = vshrl.u32 %v87, 7
    %v89 = vsub.s32 0, %v88
    %v90 = vrot.slane %v85, %v89
    %vm92 = vcmask 261120
    %v94 = vsel %vm92, %v80, 0
    %96 = vmatprep.subr.mxu0 0.0
    %97 = vmatpush1.msra.mxu0 %v81
    %98 = vmatprep.subr.mxu0 0.0
    %99 = vmatpush1.msra.mxu0 %v82
    %100 = vmatprep.subr.mxu0 0.0
    %101 = vmatpush1.msra.mxu0 %v83
    %102 = vmatprep.subr.mxu0 0.0
    %103 = vmatpush1.msra.mxu0 %v84
    %104 = vmatprep.subr.mxu0 0.0
    %105 = vmatpush1.msra.mxu0 0.0
    %106 = vmatprep.subr.mxu0 0.0
    %107 = vmatpush1.msra.mxu0 0.0
    %108 = vmatprep.subr.mxu0 0.0
    %109 = vmatpush1.msra.mxu0 0.0
    %110 = vmatprep.subr.mxu0 0.0
    %111 = vmatpush1.msra.mxu0 0.0
    %112 = vmatprep.subr.mxu0 0.0
    %113 = vmatpush1.msra.mxu0 0.0
    %114 = vmatprep.subr.mxu0 0.0
    %115 = vmatpush1.msra.mxu0 0.0
    %116 = vmatprep.subr.mxu0 0.0
    %117 = vmatpush1.msra.mxu0 0.0
    %118 = vmatprep.subr.mxu0 0.0
    %119 = vmatpush1.msra.mxu0 0.0
    %120 = vmatprep.subr.mxu0 0.0
    %121 = vmatpush1.msra.mxu0 0.0
    %122 = vmatprep.subr.mxu0 0.0
    %123 = vmatpush1.msra.mxu0 0.0
    %124 = vmatprep.subr.mxu0 0.0
    %125 = vmatpush1.msra.mxu0 0.0
    %126 = vmatprep.subr.mxu0 0.0
    %127 = vmatpush1.msra.mxu0 0.0
    %128 = vmatprep.subr.mxu0 0.0
    %129 = vmatpush1.msra.mxu0 0.0
    %130 = vmatprep.subr.mxu0 0.0
    %131 = vmatpush1.msra.mxu0 0.0
    %132 = vmatprep.subr.mxu0 0.0
    %133 = vmatpush1.msra.mxu0 0.0
    %134 = vmatprep.subr.mxu0 0.0
    %135 = vmatpush1.msra.mxu0 0.0
    %136 = vmatprep.subr.mxu0 0.0
    %137 = vmatpush1.msra.mxu0 0.0
    %138 = vmatprep.subr.mxu0 0.0
    %139 = vmatpush1.msra.mxu0 0.0
    %140 = vmatprep.subr.mxu0 0.0
    %141 = vmatpush1.msra.mxu0 0.0
    %142 = vmatprep.subr.mxu0 0.0
    %143 = vmatpush1.msra.mxu0 0.0
    %144 = vmatprep.subr.mxu0 0.0
    %145 = vmatpush1.msra.mxu0 0.0
    %146 = vmatprep.subr.mxu0 0.0
    %147 = vmatpush1.msra.mxu0 0.0
    %148 = vmatprep.subr.mxu0 0.0
    %149 = vmatpush1.msra.mxu0 0.0
    %150 = vmatprep.subr.mxu0 0.0
    %151 = vmatpush1.msra.mxu0 0.0
    %152 = vmatprep.subr.mxu0 0.0
    %153 = vmatpush1.msra.mxu0 0.0
    %154 = vmatprep.subr.mxu0 0.0
    %155 = vmatpush1.msra.mxu0 0.0
    %156 = vmatprep.subr.mxu0 0.0
    %157 = vmatpush1.msra.mxu0 0.0
    %158 = vmatprep.subr.mxu0 0.0
    %159 = vmatpush1.msra.mxu0 0.0
    %160 = vmatprep.mubr.f32.mxu0 0.0
    %161 = vmatmul.mubr.f32.gmra.mrb[0].mxu0 %v94
    %v162 = vpop.f32.mrb[0].mxu0
    %v163 = vadd.f32 %v90, %v162
    %v164 = vpop.f32.mrb[0].mxu0
    %165 = vdwg.mxu0
    %v166 = vmax.f32 %v163, 0.0
    %v167 = vld [vmem:[#allocation7] sm:$0xff]
    %v168 = vld [vmem:[#allocation7 + $0x8] sm:$0xff]
    %v169 = vld [vmem:[#allocation7 + $0x10] sm:$0xff]
    %v170 = vld [vmem:[#allocation7 + $0x18] sm:$0xff]
    %v171 = vld [vmem:[#allocation7 + $0x20] sm:$0xff]
    %v172 = vld [vmem:[#allocation7 + $0x28] sm:$0xff]
    %v173 = vld [vmem:[#allocation7 + $0x30] sm:$0xff]
    %v174 = vld [vmem:[#allocation7 + $0x38] sm:$0xff]
    %v175 = vld [vmem:[#allocation7 + $0x40] sm:$0xff]
    %v176 = vld [vmem:[#allocation7 + $0x48] sm:$0xff]
    %v177 = vld [vmem:[#allocation7 + $0x50] sm:$0xff]
    %v178 = vld [vmem:[#allocation7 + $0x58] sm:$0xff]
    %v179 = vld [vmem:[#allocation7 + $0x60] sm:$0xff]
    %v180 = vld [vmem:[#allocation7 + $0x68] sm:$0xff]
    %v181 = vld [vmem:[#allocation7 + $0x70] sm:$0xff]
    %v182 = vld [vmem:[#allocation7 + $0x78] sm:$0xff]
    %v183 = vld [vmem:[%s4] sm:$0x1]
    %v185 = vlaneseq
    %v186 = vshrl.u32 %v185, 7
    %v187 = vsub.s32 0, %v186
    %v188 = vrot.slane %v183, %v187
    %190 = vmatprep.subr.mxu0 0.0
    %191 = vmatpush1.msra.mxu0 %v167
    %192 = vmatprep.subr.mxu0 0.0
    %193 = vmatpush1.msra.mxu0 %v168
    %194 = vmatprep.subr.mxu0 0.0
    %195 = vmatpush1.msra.mxu0 %v169
    %196 = vmatprep.subr.mxu0 0.0
    %197 = vmatpush1.msra.mxu0 %v170
    %198 = vmatprep.subr.mxu0 0.0
    %199 = vmatpush1.msra.mxu0 %v171
    %200 = vmatprep.subr.mxu0 0.0
    %201 = vmatpush1.msra.mxu0 %v172
    %202 = vmatprep.subr.mxu0 0.0
    %203 = vmatpush1.msra.mxu0 %v173
    %204 = vmatprep.subr.mxu0 0.0
    %205 = vmatpush1.msra.mxu0 %v174
    %206 = vmatprep.subr.mxu0 0.0
    %207 = vmatpush1.msra.mxu0 %v175
    %208 = vmatprep.subr.mxu0 0.0
    %209 = vmatpush1.msra.mxu0 %v176
    %210 = vmatprep.subr.mxu0 0.0
    %211 = vmatpush1.msra.mxu0 %v177
    %212 = vmatprep.subr.mxu0 0.0
    %213 = vmatpush1.msra.mxu0 %v178
    %214 = vmatprep.subr.mxu0 0.0
    %215 = vmatpush1.msra.mxu0 %v179
    %216 = vmatprep.subr.mxu0 0.0
    %217 = vmatpush1.msra.mxu0 %v180
    %218 = vmatprep.subr.mxu0 0.0
    %219 = vmatpush1.msra.mxu0 %v181
    %220 = vmatprep.subr.mxu0 0.0
    %221 = vmatpush1.msra.mxu0 %v182
    %222 = vmatprep.subr.mxu0 0.0
    %223 = vmatpush1.msra.mxu0 0.0
    %224 = vmatprep.subr.mxu0 0.0
    %225 = vmatpush1.msra.mxu0 0.0
    %226 = vmatprep.subr.mxu0 0.0
    %227 = vmatpush1.msra.mxu0 0.0
    %228 = vmatprep.subr.mxu0 0.0
    %229 = vmatpush1.msra.mxu0 0.0
    %230 = vmatprep.subr.mxu0 0.0
    %231 = vmatpush1.msra.mxu0 0.0
    %232 = vmatprep.subr.mxu0 0.0
    %233 = vmatpush1.msra.mxu0 0.0
    %234 = vmatprep.subr.mxu0 0.0
    %235 = vmatpush1.msra.mxu0 0.0
    %236 = vmatprep.subr.mxu0 0.0
    %237 = vmatpush1.msra.mxu0 0.0
    %238 = vmatprep.subr.mxu0 0.0
    %239 = vmatpush1.msra.mxu0 0.0
    %240 = vmatprep.subr.mxu0 0.0
    %241 = vmatpush1.msra.mxu0 0.0
    %242 = vmatprep.subr.mxu0 0.0
    %243 = vmatpush1.msra.mxu0 0.0
    %244 = vmatprep.subr.mxu0 0.0
    %245 = vmatpush1.msra.mxu0 0.0
    %246 = vmatprep.subr.mxu0 0.0
    %247 = vmatpush1.msra.mxu0 0.0
    %248 = vmatprep.subr.mxu0 0.0
    %249 = vmatpush1.msra.mxu0 0.0
    %250 = vmatprep.subr.mxu0 0.0
    %251 = vmatpush1.msra.mxu0 0.0
    %252 = vmatprep.subr.mxu0 0.0
    %253 = vmatpush1.msra.mxu0 0.0
    %254 = vmatprep.mubr.f32.mxu0 0.0
    %255 = vmatmul.mubr.f32.gmra.mrb[0].mxu0 %v166
    %v256 = vpop.f32.mrb[0].mxu0
    %v257 = vadd.f32 %v188, %v256
    %v258 = vpop.f32.mrb[0].mxu0
    %259 = vdwg.mxu0
    %v260 = vmax.f32 %v257, 0.0
    %v261 = vld [vmem:[#allocation8] sm:$0xff]
    %v262 = vld [vmem:[#allocation8 + $0x8] sm:$0xff]
    %v263 = vld [vmem:[#allocation8 + $0x10] sm:$0xff]
    %v264 = vld [vmem:[#allocation8 + $0x18] sm:$0xff]
    %v265 = vld [vmem:[#allocation8 + $0x20] sm:$0xff]
    %v266 = vld [vmem:[#allocation8 + $0x28] sm:$0xff]
    %v267 = vld [vmem:[#allocation8 + $0x30] sm:$0xff]
    %v268 = vld [vmem:[#allocation8 + $0x38] sm:$0xff]
    %v269 = vld [vmem:[#allocation8 + $0x40] sm:$0xff]
    %v270 = vld [vmem:[#allocation8 + $0x48] sm:$0xff]
    %v271 = vld [vmem:[#allocation8 + $0x50] sm:$0xff]
    %v272 = vld [vmem:[#allocation8 + $0x58] sm:$0xff]
    %v273 = vld [vmem:[#allocation8 + $0x60] sm:$0xff]
    %v274 = vld [vmem:[#allocation8 + $0x68] sm:$0xff]
    %v275 = vld [vmem:[#allocation8 + $0x70] sm:$0xff]
    %v276 = vld [vmem:[#allocation8 + $0x78] sm:$0xff]
    %v277 = vld [vmem:[%s6] sm:$0x1]
    %v279 = vlaneseq
    %v280 = vshrl.u32 %v279, 7
    %v281 = vsub.s32 0, %v280
    %v282 = vrot.slane %v277, %v281
    %284 = vmatprep.subr.mxu0 0.0
    %285 = vmatpush1.msra.mxu0 %v261
    %286 = vmatprep.subr.mxu0 0.0
    %287 = vmatpush1.msra.mxu0 %v262
    %288 = vmatprep.subr.mxu0 0.0
    %289 = vmatpush1.msra.mxu0 %v263
    %290 = vmatprep.subr.mxu0 0.0
    %291 = vmatpush1.msra.mxu0 %v264
    %292 = vmatprep.subr.mxu0 0.0
    %293 = vmatpush1.msra.mxu0 %v265
    %294 = vmatprep.subr.mxu0 0.0
    %295 = vmatpush1.msra.mxu0 %v266
    %296 = vmatprep.subr.mxu0 0.0
    %297 = vmatpush1.msra.mxu0 %v267
    %298 = vmatprep.subr.mxu0 0.0
    %299 = vmatpush1.msra.mxu0 %v268
    %300 = vmatprep.subr.mxu0 0.0
    %301 = vmatpush1.msra.mxu0 %v269
    %302 = vmatprep.subr.mxu0 0.0
    %303 = vmatpush1.msra.mxu0 %v270
    %304 = vmatprep.subr.mxu0 0.0
    %305 = vmatpush1.msra.mxu0 %v271
    %306 = vmatprep.subr.mxu0 0.0
    %307 = vmatpush1.msra.mxu0 %v272
    %308 = vmatprep.subr.mxu0 0.0
    %309 = vmatpush1.msra.mxu0 %v273
    %310 = vmatprep.subr.mxu0 0.0
    %311 = vmatpush1.msra.mxu0 %v274
    %312 = vmatprep.subr.mxu0 0.0
    %313 = vmatpush1.msra.mxu0 %v275
    %314 = vmatprep.subr.mxu0 0.0
    %315 = vmatpush1.msra.mxu0 %v276
    %316 = vmatprep.subr.mxu0 0.0
    %317 = vmatpush1.msra.mxu0 0.0
    %318 = vmatprep.subr.mxu0 0.0
    %319 = vmatpush1.msra.mxu0 0.0
    %320 = vmatprep.subr.mxu0 0.0
    %321 = vmatpush1.msra.mxu0 0.0
    %322 = vmatprep.subr.mxu0 0.0
    %323 = vmatpush1.msra.mxu0 0.0
    %324 = vmatprep.subr.mxu0 0.0
    %325 = vmatpush1.msra.mxu0 0.0
    %326 = vmatprep.subr.mxu0 0.0
    %327 = vmatpush1.msra.mxu0 0.0
    %328 = vmatprep.subr.mxu0 0.0
    %329 = vmatpush1.msra.mxu0 0.0
    %330 = vmatprep.subr.mxu0 0.0
    %331 = vmatpush1.msra.mxu0 0.0
    %332 = vmatprep.subr.mxu0 0.0
    %333 = vmatpush1.msra.mxu0 0.0
    %334 = vmatprep.subr.mxu0 0.0
    %335 = vmatpush1.msra.mxu0 0.0
    %336 = vmatprep.subr.mxu0 0.0
    %337 = vmatpush1.msra.mxu0 0.0
    %338 = vmatprep.subr.mxu0 0.0
    %339 = vmatpush1.msra.mxu0 0.0
    %340 = vmatprep.subr.mxu0 0.0
    %341 = vmatpush1.msra.mxu0 0.0
    %342 = vmatprep.subr.mxu0 0.0
    %343 = vmatpush1.msra.mxu0 0.0
    %344 = vmatprep.subr.mxu0 0.0
    %345 = vmatpush1.msra.mxu0 0.0
    %346 = vmatprep.subr.mxu0 0.0
    %347 = vmatpush1.msra.mxu0 0.0
    %348 = vmatprep.mubr.f32.mxu0 0.0
    %349 = vmatmul.mubr.f32.gmra.mrb[0].mxu0 %v260
    %v350 = vpop.f32.mrb[0].mxu0
    %v351 = vadd.f32 %v282, %v350
    %v352 = vpop.f32.mrb[0].mxu0
    %353 = vdwg.mxu0
    %354 = vst [vmem:[#allocation10] sm:$0xff] %v351
    // Predicated region
    $region46: #{tpu_custom_call.1} parent=1 // pred_check
      _
    $region47: #{tpu_custom_call.1} parent=1 // pred_check_branch
      %356 = sbr.rel (0) target = $region49
    $region48: #{tpu_custom_call.1} parent=1 // pred_region
      %s358 = ssub.s32 128, 128
      %359 = vsyncadd [#allocation4], %s358
      %s361 = sshll.u32 [#allocation10], 4
      %s362 = int_to_ptr.vmem [resolvable:$true] %s361
      %364 = dma.vmem_to_hbm [thread:$0]  %s362, 128, %s7, [#allocation4]
    $region49: #{tpu_custom_call.1} parent=1 // pred_fallthru
      _
    // Predicated region
    $region50: #{tpu_custom_call.1} parent=1 // pred_check
      _
    $region51: #{tpu_custom_call.1} parent=1 // pred_check_branch
      %366 = sbr.rel (0) target = $region53
    $region52: #{tpu_custom_call.1} parent=1 // pred_region
      %367 = dma.done [#allocation4], 128
    $region53: #{tpu_custom_call.1} parent=1 // pred_fallthru
      _
    %368 = vsyncpa [#allocation3], 1
    %369 = vsyncpa [#allocation6], 1
    %370 = vsyncpa [#allocation9], 1
    %371 = vsyncpa [#allocation4], 1

// kernel: tpu_custom_call.1
$region0: #{tpu_custom_call.1}
  #allocation0 [shape = 'u32[]', space=smem, size = 0x4, offset = 0x4, fixed_abs, tag = 'smem constant byte address 0x4 - core index']
  #allocation1 [shape = 'u32[144,128]{1,0:T(1,128)}', space=vmem, size = 0x12000, scoped, tag = 'internal scratch']
  %s0 = inlined_call_operand.hbm [shape: f32[8,32], index: 0, kind: input, shape index: {}]
  %s1 = inlined_call_operand.hbm [shape: f32[32,128], index: 1, kind: input, shape index: {}]
  %s2 = inlined_call_operand.vmem [shape: f32[1,128], index: 2, kind: input, shape index: {}]
  %s3 = inlined_call_operand.hbm [shape: f32[128,128], index: 3, kind: input, shape index: {}]
  %s4 = inlined_call_operand.vmem [shape: f32[1,128], index: 4, kind: input, shape index: {}]
  %s5 = inlined_call_operand.hbm [shape: f32[128,128], index: 5, kind: input, shape index: {}]
  %s6 = inlined_call_operand.vmem [shape: f32[1,128], index: 6, kind: input, shape index: {}]
  %s7 = inlined_call_operand.hbm [shape: f32[8,128], index: 7, kind: output, shape index: {}]
  %s8 = sld [smem:[#allocation0]]
  $region54: #{tpu_custom_call.1} parent=0
    _
  %s10 = ssub.s32 1, %s8
  %s11 = scalar_select 0, %s10, %s8
  $region1: #{tpu_custom_call.1} parent=0
    #allocation2 [shape = 'u8[4096]{0}', space=vmem, size = 0x1000, scoped, tag = 'input window, operand 0, single buffered']
    #allocation3 [shape = 's32[1]{0}', space=sflag, size = 0x4, scoped, tag = 'scoped memory for tpu_custom_call.1']
    #allocation4 [shape = 's32[1]{0}', space=sflag, size = 0x4, scoped, tag = 'scoped memory for tpu_custom_call.1']
    #allocation5 [shape = 'u8[16384]{0}', space=vmem, size = 0x4000, scoped, tag = 'input window, operand 1, single buffered']
    #allocation6 [shape = 's32[1]{0}', space=sflag, size = 0x4, scoped, tag = 'scoped memory for tpu_custom_call.1']
    #allocation7 [shape = 'u8[65536]{0}', space=vmem, size = 0x10000, scoped, tag = 'input window, operand 3, single buffered']
    #allocation8 [shape = 'u8[65536]{0}', space=vmem, size = 0x10000, scoped, tag = 'input window, operand 5, single buffered']
    #allocation9 [shape = 's32[1]{0}', space=sflag, size = 0x4, scoped, tag = 'scoped memory for tpu_custom_call.1']
    #allocation10 [shape = 'u8[4096]{0}', space=vmem, size = 0x1000, scoped, tag = 'output window, operand 0, single buffered']
    %12 = vsyncpa [#allocation3], 0
    %13 = vsyncpa [#allocation6], 0
    %14 = vsyncpa [#allocation9], 0
    %15 = vsyncpa [#allocation4], 0
    // Predicated region
    $region2: #{tpu_custom_call.1} parent=1 // pred_check
      _
    $region3: #{tpu_custom_call.1} parent=1 // pred_check_branch
      %17 = sbr.rel (0) target = $region5
    $region4: #{tpu_custom_call.1} parent=1 // pred_region
      %s19 = ssub.s32 128, 128
      %20 = vsyncadd [#allocation3], %s19
      %s22 = sshll.u32 [#allocation2], 4
      %s23 = int_to_ptr.vmem [resolvable:$true] %s22
      %25 = dma.hbm_to_vmem [thread:$0]  %s0, 128, %s23, [#allocation3]
    $region5: #{tpu_custom_call.1} parent=1 // pred_fallthru
      _
    // Predicated region
    $region6: #{tpu_custom_call.1} parent=1 // pred_check
      _
    $region7: #{tpu_custom_call.1} parent=1 // pred_check_branch
      %27 = sbr.rel (0) target = $region9
    $region8: #{tpu_custom_call.1} parent=1 // pred_region
      %s29 = ssub.s32 512, 512
      %30 = vsyncadd [#allocation6], %s29
      %s31 = sshll.u32 [#allocation5], 4
      %s32 = int_to_ptr.vmem [resolvable:$true] %s31
      %37 = dma.hbm_to_vmem [thread:$0]  %s1, 512, %s32, [#allocation6], 128, 128, 8
    $region9: #{tpu_custom_call.1} parent=1 // pred_fallthru
      _
    // Predicated region
    $region10: #{tpu_custom_call.1} parent=1 // pred_check
      _
    $region11: #{tpu_custom_call.1} parent=1 // pred_check_branch
      %39 = sbr.rel (0) target = $region13
    $region12: #{tpu_custom_call.1} parent=1 // pred_region
      _
    $region13: #{tpu_custom_call.1} parent=1 // pred_fallthru
      _
    // Predicated region
    $region14: #{tpu_custom_call.1} parent=1 // pred_check
      _
    $region15: #{tpu_custom_call.1} parent=1 // pred_check_branch
      %41 = sbr.rel (0) target = $region17
    $region16: #{tpu_custom_call.1} parent=1 // pred_region
      %s43 = ssub.s32 2048, 2048
      %44 = vsyncadd [#allocation6], %s43
      %s45 = sshll.u32 [#allocation7], 4
      %s46 = int_to_ptr.vmem [resolvable:$true] %s45
      %51 = dma.hbm_to_vmem [thread:$0]  %s3, 2048, %s46, [#allocation6], 128, 128, 8
    $region17: #{tpu_custom_call.1} parent=1 // pred_fallthru
      _
    // Predicated region
    $region18: #{tpu_custom_call.1} parent=1 // pred_check
      _
    $region19: #{tpu_custom_call.1} parent=1 // pred_check_branch
      %53 = sbr.rel (0) target = $region21
    $region20: #{tpu_custom_call.1} parent=1 // pred_region
      _
    $region21: #{tpu_custom_call.1} parent=1 // pred_fallthru
      _
    // Predicated region
    $region22: #{tpu_custom_call.1} parent=1 // pred_check
      _
    $region23: #{tpu_custom_call.1} parent=1 // pred_check_branch
      %55 = sbr.rel (0) target = $region25
    $region24: #{tpu_custom_call.1} parent=1 // pred_region
      %s57 = ssub.s32 2048, 2048
      %58 = vsyncadd [#allocation9], %s57
      %s59 = sshll.u32 [#allocation8], 4
      %s60 = int_to_ptr.vmem [resolvable:$true] %s59
      %65 = dma.hbm_to_vmem [thread:$0]  %s5, 2048, %s60, [#allocation9], 128, 128, 8
    $region25: #{tpu_custom_call.1} parent=1 // pred_fallthru
      _
    // Predicated region
    $region26: #{tpu_custom_call.1} parent=1 // pred_check
      _
    $region27: #{tpu_custom_call.1} parent=1 // pred_check_branch
      %67 = sbr.rel (0) target = $region29
    $region28: #{tpu_custom_call.1} parent=1 // pred_region
      _
    $region29: #{tpu_custom_call.1} parent=1 // pred_fallthru
      _
    // Predicated region
    $region30: #{tpu_custom_call.1} parent=1 // pred_check
      _
    $region31: #{tpu_custom_call.1} parent=1 // pred_check_branch
      %69 = sbr.rel (0) target = $region33
    $region32: #{tpu_custom_call.1} parent=1 // pred_region
      %70 = dma.done [#allocation3], 128
    $region33: #{tpu_custom_call.1} parent=1 // pred_fallthru
      _
    // Predicated region
    $region34: #{tpu_custom_call.1} parent=1 // pred_check
      _
    $region35: #{tpu_custom_call.1} parent=1 // pred_check_branch
      %72 = sbr.rel (0) target = $region37
    $region36: #{tpu_custom_call.1} parent=1 // pred_region
      %73 = dma.done [#allocation6], 512
    $region37: #{tpu_custom_call.1} parent=1 // pred_fallthru
      _
    // Predicated region
    $region38: #{tpu_custom_call.1} parent=1 // pred_check
      _
    $region39: #{tpu_custom_call.1} parent=1 // pred_check_branch
      %75 = sbr.rel (0) target = $region41
    $region40: #{tpu_custom_call.1} parent=1 // pred_region
      %76 = dma.done [#allocation6], 2048
    $region41: #{tpu_custom_call.1} parent=1 // pred_fallthru
      _
    // Predicated region
    $region42: #{tpu_custom_call.1} parent=1 // pred_check
      _
    $region43: #{tpu_custom_call.1} parent=1 // pred_check_branch
      %78 = sbr.rel (0) target = $region45
    $region44: #{tpu_custom_call.1} parent=1 // pred_region
      %79 = dma.done [#allocation9], 2048
    $region45: #{tpu_custom_call.1} parent=1 // pred_fallthru
      _
    %v80 = vld [vmem:[#allocation2] sm:$0xff]
    %v81 = vld [vmem:[#allocation5] sm:$0xff]
    %v82 = vld [vmem:[#allocation5 + $0x8] sm:$0xff]
    %v83 = vld [vmem:[#allocation5 + $0x10] sm:$0xff]
    %v84 = vld [vmem:[#allocation5 + $0x18] sm:$0xff]
    %v85 = vld [vmem:[%s2] sm:$0x1]
    %v87 = vlaneseq
    %v88 = vshrl.u32 %v87, 7
    %v89 = vsub.s32 0, %v88
    %v90 = vrot.slane %v85, %v89
    %vm92 = vcmask 261120
    %v94 = vsel %vm92, %v80, 0
    %96 = vmatprep.subr.mxu0 0.0
    %97 = vmatpush1.msra.mxu0 %v81
    %98 = vmatprep.subr.mxu0 0.0
    %99 = vmatpush1.msra.mxu0 %v82
    %100 = vmatprep.subr.mxu0 0.0
    %101 = vmatpush1.msra.mxu0 %v83
    %102 = vmatprep.subr.mxu0 0.0
    %103 = vmatpush1.msra.mxu0 %v84
    %104 = vmatprep.subr.mxu0 0.0
    %105 = vmatpush1.msra.mxu0 0.0
    %106 = vmatprep.subr.mxu0 0.0
    %107 = vmatpush1.msra.mxu0 0.0
    %108 = vmatprep.subr.mxu0 0.0
    %109 = vmatpush1.msra.mxu0 0.0
    %110 = vmatprep.subr.mxu0 0.0
    %111 = vmatpush1.msra.mxu0 0.0
    %112 = vmatprep.subr.mxu0 0.0
    %113 = vmatpush1.msra.mxu0 0.0
    %114 = vmatprep.subr.mxu0 0.0
    %115 = vmatpush1.msra.mxu0 0.0
    %116 = vmatprep.subr.mxu0 0.0
    %117 = vmatpush1.msra.mxu0 0.0
    %118 = vmatprep.subr.mxu0 0.0
    %119 = vmatpush1.msra.mxu0 0.0
    %120 = vmatprep.subr.mxu0 0.0
    %121 = vmatpush1.msra.mxu0 0.0
    %122 = vmatprep.subr.mxu0 0.0
    %123 = vmatpush1.msra.mxu0 0.0
    %124 = vmatprep.subr.mxu0 0.0
    %125 = vmatpush1.msra.mxu0 0.0
    %126 = vmatprep.subr.mxu0 0.0
    %127 = vmatpush1.msra.mxu0 0.0
    %128 = vmatprep.subr.mxu0 0.0
    %129 = vmatpush1.msra.mxu0 0.0
    %130 = vmatprep.subr.mxu0 0.0
    %131 = vmatpush1.msra.mxu0 0.0
    %132 = vmatprep.subr.mxu0 0.0
    %133 = vmatpush1.msra.mxu0 0.0
    %134 = vmatprep.subr.mxu0 0.0
    %135 = vmatpush1.msra.mxu0 0.0
    %136 = vmatprep.subr.mxu0 0.0
    %137 = vmatpush1.msra.mxu0 0.0
    %138 = vmatprep.subr.mxu0 0.0
    %139 = vmatpush1.msra.mxu0 0.0
    %140 = vmatprep.subr.mxu0 0.0
    %141 = vmatpush1.msra.mxu0 0.0
    %142 = vmatprep.subr.mxu0 0.0
    %143 = vmatpush1.msra.mxu0 0.0
    %144 = vmatprep.subr.mxu0 0.0
    %145 = vmatpush1.msra.mxu0 0.0
    %146 = vmatprep.subr.mxu0 0.0
    %147 = vmatpush1.msra.mxu0 0.0
    %148 = vmatprep.subr.mxu0 0.0
    %149 = vmatpush1.msra.mxu0 0.0
    %150 = vmatprep.subr.mxu0 0.0
    %151 = vmatpush1.msra.mxu0 0.0
    %152 = vmatprep.subr.mxu0 0.0
    %153 = vmatpush1.msra.mxu0 0.0
    %154 = vmatprep.subr.mxu0 0.0
    %155 = vmatpush1.msra.mxu0 0.0
    %156 = vmatprep.subr.mxu0 0.0
    %157 = vmatpush1.msra.mxu0 0.0
    %158 = vmatprep.subr.mxu0 0.0
    %159 = vmatpush1.msra.mxu0 0.0
    %160 = vmatprep.mubr.f32.mxu0 0.0
    %161 = vmatmul.mubr.f32.gmra.mrb[0].mxu0 %v94
    %v162 = vpop.f32.mrb[0].mxu0
    %v163 = vadd.f32 %v90, %v162
    %v164 = vpop.f32.mrb[0].mxu0
    %165 = vdwg.mxu0
    %v166 = vmax.f32 %v163, 0.0
    %v167 = vld [vmem:[#allocation7] sm:$0xff]
    %v168 = vld [vmem:[#allocation7 + $0x8] sm:$0xff]
    %v169 = vld [vmem:[#allocation7 + $0x10] sm:$0xff]
    %v170 = vld [vmem:[#allocation7 + $0x18] sm:$0xff]
    %v171 = vld [vmem:[#allocation7 + $0x20] sm:$0xff]
    %v172 = vld [vmem:[#allocation7 + $0x28] sm:$0xff]
    %v173 = vld [vmem:[#allocation7 + $0x30] sm:$0xff]
    %v174 = vld [vmem:[#allocation7 + $0x38] sm:$0xff]
    %v175 = vld [vmem:[#allocation7 + $0x40] sm:$0xff]
    %v176 = vld [vmem:[#allocation7 + $0x48] sm:$0xff]
    %v177 = vld [vmem:[#allocation7 + $0x50] sm:$0xff]
    %v178 = vld [vmem:[#allocation7 + $0x58] sm:$0xff]
    %v179 = vld [vmem:[#allocation7 + $0x60] sm:$0xff]
    %v180 = vld [vmem:[#allocation7 + $0x68] sm:$0xff]
    %v181 = vld [vmem:[#allocation7 + $0x70] sm:$0xff]
    %v182 = vld [vmem:[#allocation7 + $0x78] sm:$0xff]
    %v183 = vld [vmem:[%s4] sm:$0x1]
    %v185 = vlaneseq
    %v186 = vshrl.u32 %v185, 7
    %v187 = vsub.s32 0, %v186
    %v188 = vrot.slane %v183, %v187
    %190 = vmatprep.subr.mxu0 0.0
    %191 = vmatpush1.msra.mxu0 %v167
    %192 = vmatprep.subr.mxu0 0.0
    %193 = vmatpush1.msra.mxu0 %v168
    %194 = vmatprep.subr.mxu0 0.0
    %195 = vmatpush1.msra.mxu0 %v169
    %196 = vmatprep.subr.mxu0 0.0
    %197 = vmatpush1.msra.mxu0 %v170
    %198 = vmatprep.subr.mxu0 0.0
    %199 = vmatpush1.msra.mxu0 %v171
    %200 = vmatprep.subr.mxu0 0.0
    %201 = vmatpush1.msra.mxu0 %v172
    %202 = vmatprep.subr.mxu0 0.0
    %203 = vmatpush1.msra.mxu0 %v173
    %204 = vmatprep.subr.mxu0 0.0
    %205 = vmatpush1.msra.mxu0 %v174
    %206 = vmatprep.subr.mxu0 0.0
    %207 = vmatpush1.msra.mxu0 %v175
    %208 = vmatprep.subr.mxu0 0.0
    %209 = vmatpush1.msra.mxu0 %v176
    %210 = vmatprep.subr.mxu0 0.0
    %211 = vmatpush1.msra.mxu0 %v177
    %212 = vmatprep.subr.mxu0 0.0
    %213 = vmatpush1.msra.mxu0 %v178
    %214 = vmatprep.subr.mxu0 0.0
    %215 = vmatpush1.msra.mxu0 %v179
    %216 = vmatprep.subr.mxu0 0.0
    %217 = vmatpush1.msra.mxu0 %v180
    %218 = vmatprep.subr.mxu0 0.0
    %219 = vmatpush1.msra.mxu0 %v181
    %220 = vmatprep.subr.mxu0 0.0
    %221 = vmatpush1.msra.mxu0 %v182
    %222 = vmatprep.subr.mxu0 0.0
    %223 = vmatpush1.msra.mxu0 0.0
    %224 = vmatprep.subr.mxu0 0.0
    %225 = vmatpush1.msra.mxu0 0.0
    %226 = vmatprep.subr.mxu0 0.0
    %227 = vmatpush1.msra.mxu0 0.0
    %228 = vmatprep.subr.mxu0 0.0
    %229 = vmatpush1.msra.mxu0 0.0
    %230 = vmatprep.subr.mxu0 0.0
    %231 = vmatpush1.msra.mxu0 0.0
    %232 = vmatprep.subr.mxu0 0.0
    %233 = vmatpush1.msra.mxu0 0.0
    %234 = vmatprep.subr.mxu0 0.0
    %235 = vmatpush1.msra.mxu0 0.0
    %236 = vmatprep.subr.mxu0 0.0
    %237 = vmatpush1.msra.mxu0 0.0
    %238 = vmatprep.subr.mxu0 0.0
    %239 = vmatpush1.msra.mxu0 0.0
    %240 = vmatprep.subr.mxu0 0.0
    %241 = vmatpush1.msra.mxu0 0.0
    %242 = vmatprep.subr.mxu0 0.0
    %243 = vmatpush1.msra.mxu0 0.0
    %244 = vmatprep.subr.mxu0 0.0
    %245 = vmatpush1.msra.mxu0 0.0
    %246 = vmatprep.subr.mxu0 0.0
    %247 = vmatpush1.msra.mxu0 0.0
    %248 = vmatprep.subr.mxu0 0.0
    %249 = vmatpush1.msra.mxu0 0.0
    %250 = vmatprep.subr.mxu0 0.0
    %251 = vmatpush1.msra.mxu0 0.0
    %252 = vmatprep.subr.mxu0 0.0
    %253 = vmatpush1.msra.mxu0 0.0
    %254 = vmatprep.mubr.f32.mxu0 0.0
    %255 = vmatmul.mubr.f32.gmra.mrb[0].mxu0 %v166
    %v256 = vpop.f32.mrb[0].mxu0
    %v257 = vadd.f32 %v188, %v256
    %v258 = vpop.f32.mrb[0].mxu0
    %259 = vdwg.mxu0
    %v260 = vmax.f32 %v257, 0.0
    %v261 = vld [vmem:[#allocation8] sm:$0xff]
    %v262 = vld [vmem:[#allocation8 + $0x8] sm:$0xff]
    %v263 = vld [vmem:[#allocation8 + $0x10] sm:$0xff]
    %v264 = vld [vmem:[#allocation8 + $0x18] sm:$0xff]
    %v265 = vld [vmem:[#allocation8 + $0x20] sm:$0xff]
    %v266 = vld [vmem:[#allocation8 + $0x28] sm:$0xff]
    %v267 = vld [vmem:[#allocation8 + $0x30] sm:$0xff]
    %v268 = vld [vmem:[#allocation8 + $0x38] sm:$0xff]
    %v269 = vld [vmem:[#allocation8 + $0x40] sm:$0xff]
    %v270 = vld [vmem:[#allocation8 + $0x48] sm:$0xff]
    %v271 = vld [vmem:[#allocation8 + $0x50] sm:$0xff]
    %v272 = vld [vmem:[#allocation8 + $0x58] sm:$0xff]
    %v273 = vld [vmem:[#allocation8 + $0x60] sm:$0xff]
    %v274 = vld [vmem:[#allocation8 + $0x68] sm:$0xff]
    %v275 = vld [vmem:[#allocation8 + $0x70] sm:$0xff]
    %v276 = vld [vmem:[#allocation8 + $0x78] sm:$0xff]
    %v277 = vld [vmem:[%s6] sm:$0x1]
    %v279 = vlaneseq
    %v280 = vshrl.u32 %v279, 7
    %v281 = vsub.s32 0, %v280
    %v282 = vrot.slane %v277, %v281
    %284 = vmatprep.subr.mxu0 0.0
    %285 = vmatpush1.msra.mxu0 %v261
    %286 = vmatprep.subr.mxu0 0.0
    %287 = vmatpush1.msra.mxu0 %v262
    %288 = vmatprep.subr.mxu0 0.0
    %289 = vmatpush1.msra.mxu0 %v263
    %290 = vmatprep.subr.mxu0 0.0
    %291 = vmatpush1.msra.mxu0 %v264
    %292 = vmatprep.subr.mxu0 0.0
    %293 = vmatpush1.msra.mxu0 %v265
    %294 = vmatprep.subr.mxu0 0.0
    %295 = vmatpush1.msra.mxu0 %v266
    %296 = vmatprep.subr.mxu0 0.0
    %297 = vmatpush1.msra.mxu0 %v267
    %298 = vmatprep.subr.mxu0 0.0
    %299 = vmatpush1.msra.mxu0 %v268
    %300 = vmatprep.subr.mxu0 0.0
    %301 = vmatpush1.msra.mxu0 %v269
    %302 = vmatprep.subr.mxu0 0.0
    %303 = vmatpush1.msra.mxu0 %v270
    %304 = vmatprep.subr.mxu0 0.0
    %305 = vmatpush1.msra.mxu0 %v271
    %306 = vmatprep.subr.mxu0 0.0
    %307 = vmatpush1.msra.mxu0 %v272
    %308 = vmatprep.subr.mxu0 0.0
    %309 = vmatpush1.msra.mxu0 %v273
    %310 = vmatprep.subr.mxu0 0.0
    %311 = vmatpush1.msra.mxu0 %v274
    %312 = vmatprep.subr.mxu0 0.0
    %313 = vmatpush1.msra.mxu0 %v275
    %314 = vmatprep.subr.mxu0 0.0
    %315 = vmatpush1.msra.mxu0 %v276
    %316 = vmatprep.subr.mxu0 0.0
    %317 = vmatpush1.msra.mxu0 0.0
    %318 = vmatprep.subr.mxu0 0.0
    %319 = vmatpush1.msra.mxu0 0.0
    %320 = vmatprep.subr.mxu0 0.0
    %321 = vmatpush1.msra.mxu0 0.0
    %322 = vmatprep.subr.mxu0 0.0
    %323 = vmatpush1.msra.mxu0 0.0
    %324 = vmatprep.subr.mxu0 0.0
    %325 = vmatpush1.msra.mxu0 0.0
    %326 = vmatprep.subr.mxu0 0.0
    %327 = vmatpush1.msra.mxu0 0.0
    %328 = vmatprep.subr.mxu0 0.0
    %329 = vmatpush1.msra.mxu0 0.0
    %330 = vmatprep.subr.mxu0 0.0
    %331 = vmatpush1.msra.mxu0 0.0
    %332 = vmatprep.subr.mxu0 0.0
    %333 = vmatpush1.msra.mxu0 0.0
    %334 = vmatprep.subr.mxu0 0.0
    %335 = vmatpush1.msra.mxu0 0.0
    %336 = vmatprep.subr.mxu0 0.0
    %337 = vmatpush1.msra.mxu0 0.0
    %338 = vmatprep.subr.mxu0 0.0
    %339 = vmatpush1.msra.mxu0 0.0
    %340 = vmatprep.subr.mxu0 0.0
    %341 = vmatpush1.msra.mxu0 0.0
    %342 = vmatprep.subr.mxu0 0.0
    %343 = vmatpush1.msra.mxu0 0.0
    %344 = vmatprep.subr.mxu0 0.0
    %345 = vmatpush1.msra.mxu0 0.0
    %346 = vmatprep.subr.mxu0 0.0
    %347 = vmatpush1.msra.mxu0 0.0
    %348 = vmatprep.mubr.f32.mxu0 0.0
    %349 = vmatmul.mubr.f32.gmra.mrb[0].mxu0 %v260
    %v350 = vpop.f32.mrb[0].mxu0
    %v351 = vadd.f32 %v282, %v350
    %v352 = vpop.f32.mrb[0].mxu0
    %353 = vdwg.mxu0
    %354 = vst [vmem:[#allocation10] sm:$0xff] %v351
    // Predicated region
    $region46: #{tpu_custom_call.1} parent=1 // pred_check
      _
    $region47: #{tpu_custom_call.1} parent=1 // pred_check_branch
      %356 = sbr.rel (0) target = $region49
    $region48: #{tpu_custom_call.1} parent=1 // pred_region
      %s358 = ssub.s32 128, 128
      %359 = vsyncadd [#allocation4], %s358
      %s361 = sshll.u32 [#allocation10], 4
      %s362 = int_to_ptr.vmem [resolvable:$true] %s361
      %364 = dma.vmem_to_hbm [thread:$0]  %s362, 128, %s7, [#allocation4]
    $region49: #{tpu_custom_call.1} parent=1 // pred_fallthru
      _
    // Predicated region
    $region50: #{tpu_custom_call.1} parent=1 // pred_check
      _
    $region51: #{tpu_custom_call.1} parent=1 // pred_check_branch
      %366 = sbr.rel (0) target = $region53
    $region52: #{tpu_custom_call.1} parent=1 // pred_region
      %367 = dma.done [#allocation4], 128
    $region53: #{tpu_custom_call.1} parent=1 // pred_fallthru
      _
    %368 = vsyncpa [#allocation3], 1
    %369 = vsyncpa [#allocation6], 1
    %370 = vsyncpa [#allocation9], 1
    %371 = vsyncpa [#allocation4], 1

</llo_original>
